<compile_context>
chip_gen: v6e
topology: v6e:2x2x1
jax: 0.10.0
libtpu: 0.0.40
codegen_flags: <defaults>
</compile_context>

<pallas_src>
import functools

import jax
import jax.numpy as jnp
from jax.experimental import pallas as pl
from jax.experimental.pallas import tpu as pltpu


def _round_up(a: int, b: int) -> int:
    return (a + b - 1) // b * b


def _embed_kernel_single_k(x_ref, w_ref, o_ref):
    """Whole K fits one block: no accumulator round-trip, single MXU pass."""
    o_ref[...] = jnp.dot(
        x_ref[...], w_ref[...], preferred_element_type=jnp.float32
    ).astype(o_ref.dtype)


def _embed_kernel_multi_k(x_ref, w_ref, o_ref, acc_ref, *, total_k, tk):
    """One (tm, te) output tile; grid axis 2 reduces over K."""
    k = pl.program_id(2)
    last = pl.num_programs(2) - 1

    @pl.when(k == 0)
    def _init():
        acc_ref[...] = jnp.zeros_like(acc_ref)

    rem = total_k % tk  # static at trace time
    if rem == 0:
        acc_ref[...] += jnp.dot(
            x_ref[...], w_ref[...], preferred_element_type=jnp.float32
        )
    else:
        # Ragged K tail: keep masking off the hot path. Full-speed dot on all
        # but the final K step; masked dot (both operands, so stale NaN/Inf in
        # the out-of-bounds tail cannot poison valid rows) only on the last.
        @pl.when(k != last)
        def _body():
            acc_ref[...] += jnp.dot(
                x_ref[...], w_ref[...], preferred_element_type=jnp.float32
            )

        @pl.when(k == last)
        def _tail():
            xv = x_ref[...]
            wv = w_ref[...]
            col = jax.lax.broadcasted_iota(jnp.int32, xv.shape, dimension=1)
            xv = jnp.where(col < rem, xv, jnp.zeros_like(xv))
            row = jax.lax.broadcasted_iota(jnp.int32, wv.shape, dimension=0)
            wv = jnp.where(row < rem, wv, jnp.zeros_like(wv))
            acc_ref[...] += jnp.dot(xv, wv, preferred_element_type=jnp.float32)

    @pl.when(k == last)
    def _store():
        o_ref[...] = acc_ref[...].astype(o_ref.dtype)


def one_hot_to_embedding(x, weight, *, tm=512, te=512, tk=1024,
                         compute_dtype=jnp.bfloat16):
    """x: (*, num_embeddings), weight: (num_embeddings, embedding_dim)."""
    *lead, K = x.shape
    Kw, E = weight.shape
    assert K == Kw, "last dim of x must equal num_embeddings"

    out_dtype = jnp.promote_types(x.dtype, weight.dtype)

    if compute_dtype is not None:
        # bf16 operands are exact for one-hot x and halve HBM bytes of both
        # operands (the binding resource); accumulation stays f32 either way.
        # Pass compute_dtype=None for bit-exact results w.r.t. f32 weights.
        x = x.astype(compute_dtype)
        weight = weight.astype(compute_dtype)

    x2d = x.reshape(-1, K)
    M = x2d.shape[0]

    # Pad E to a lane-dense multiple of 128 (sliced back after) so output
    # stores lower to unmasked `vst` instead of masked partial stores.
    E_out = E
    if E > 128 and E % 128 != 0:
        E = _round_up(E, 128)
        weight = jnp.pad(weight, ((0, 0), (0, E - E_out)))

    # Sublane granularity of the narrowest dtype involved
    # (8 for f32, 16 for bf16, 32 for int8/fp8).
    isz = lambda d: jnp.dtype(d).itemsize
    sub = 32 // min(isz(x2d.dtype), isz(weight.dtype), isz(out_dtype))

    # Clamp tiles to the problem. A block dim equal to the full array extent
    # is always legal; otherwise keep dims (sub, 128)-aligned.
    tm = M if M <= tm else _round_up(tm, sub)
    te = E if E <= te else _round_up(te, 128)
    tk = K if K <= tk else _round_up(tk, 128)

    # v7x megacore: keep >= 2 blocks across the parallel axes so the second
    # TensorCore has work; splitting M is layout-neutral (sublane dim).
    if pl.cdiv(M, tm) * pl.cdiv(E, te) == 1 and M >= 2 * sub:
        tm = _round_up(pl.cdiv(M, 2), sub)

    grid_m, grid_e, grid_k = pl.cdiv(M, tm), pl.cdiv(E, te), pl.cdiv(K, tk)

    cost = pl.CostEstimate(
        flops=2 * M * K * E,
        transcendentals=0,
        bytes_accessed=(grid_e * M * K * isz(x2d.dtype)
                        + grid_m * K * E * isz(weight.dtype)
                        + M * E * isz(out_dtype)),
    )

    # Double-buffered ins/outs + f32 accumulator. Floor at 32 MiB (v5e's 16 MiB
    # scoped default is too small for the big tiles); cap at 48 MiB so the same
    # config fits v7x's 64 MiB physical VMEM.
    vmem_est = (2 * (tm * tk * isz(x2d.dtype) + tk * te * isz(weight.dtype)
                     + tm * te * isz(out_dtype)) + tm * te * 4)
    vmem_limit = max(32 << 20, min(2 * vmem_est + (8 << 20), 48 << 20))

    if grid_k == 1:
        # Fast path: whole vocabulary fits one K block.
        out2d = pl.pallas_call(
            _embed_kernel_single_k,
            out_shape=jax.ShapeDtypeStruct((M, E), out_dtype),
            grid_spec=pltpu.PrefetchScalarGridSpec(
                num_scalar_prefetch=0,
                grid=(grid_m, grid_e),
                in_specs=[
                    pl.BlockSpec((tm, tk), lambda i, j: (i, 0)),
                    pl.BlockSpec((tk, te), lambda i, j: (0, j)),
                ],
                out_specs=pl.BlockSpec((tm, te), lambda i, j: (i, j)),
            ),
            compiler_params=pltpu.CompilerParams(
                dimension_semantics=("parallel", "parallel"),
                vmem_limit_bytes=vmem_limit,
            ),
            cost_estimate=cost,
        )(x2d, weight)
    else:
        kernel = functools.partial(_embed_kernel_multi_k, total_k=K, tk=tk)
        out2d = pl.pallas_call(
            kernel,
            out_shape=jax.ShapeDtypeStruct((M, E), out_dtype),
            grid_spec=pltpu.PrefetchScalarGridSpec(
                num_scalar_prefetch=0,
                grid=(grid_m, grid_e, grid_k),
                in_specs=[
                    pl.BlockSpec((tm, tk), lambda i, j, k: (i, k)),
                    pl.BlockSpec((tk, te), lambda i, j, k: (k, j)),
                ],
                out_specs=pl.BlockSpec((tm, te), lambda i, j, k: (i, j)),
                scratch_shapes=[pltpu.VMEM((tm, te), jnp.float32)],
            ),
            compiler_params=pltpu.CompilerParams(
                dimension_semantics=("parallel", "parallel", "arbitrary"),
                vmem_limit_bytes=vmem_limit,
            ),
            cost_estimate=cost,
        )(x2d, weight)

    if E_out != E:
        out2d = out2d[:, :E_out]
    return out2d.reshape(*lead, E_out)


if __name__ == "__main__":
    num_embeddings = 16
    embedding_dim = 32
    batch, seq = 2, 8

    key = jax.random.PRNGKey(0)
    k_idx, k_w, k_idx2, k_w2 = jax.random.split(key, 4)

    # Deterministic weight init (stand-in for torch.randn in __init__).
    weight = jax.random.normal(k_w, (num_embeddings, embedding_dim), jnp.float32)
    idx = jax.random.randint(k_idx, (batch, seq), 0, num_embeddings)
    x = jax.nn.one_hot(idx, num_embeddings, dtype=jnp.float32)
    ref = x @ weight

    # Default path: bf16 operands (exact for one-hot x), f32 accumulation.
    out = jax.block_until_ready(one_hot_to_embedding(x, weight))
    assert out.shape == (batch, seq, embedding_dim)
    assert jnp.allclose(out, ref, atol=2e-2, rtol=2e-2)

    # Bit-exact f32 path.
    out_f32 = jax.block_until_ready(
        one_hot_to_embedding(x, weight, compute_dtype=None))
    assert jnp.allclose(out_f32, ref, atol=1e-5, rtol=1e-5)

    # Multi-step K reduction with a ragged tail (exercises accumulator scratch,
    # init/finalize, and last-step masking) via a small tk override.
    K2, E2 = 200, 32
    w2 = jax.random.normal(k_w2, (K2, E2), jnp.float32)
    idx2 = jax.random.randint(k_idx2, (batch, seq), 0, K2)
    x2 = jax.nn.one_hot(idx2, K2, dtype=jnp.float32)
    out2 = jax.block_until_ready(
        one_hot_to_embedding(x2, w2, tk=128, compute_dtype=None))
    assert jnp.allclose(out2, x2 @ w2, atol=1e-5, rtol=1e-5)

    print("KERNEL_OK")
</pallas_src>

<mosaic_0001>
module attributes {stable_mosaic.version = 11 : i64} {
  func.func @_embed_kernel_single_k(%arg0: i32, %arg1: i32, %arg2: memref<16x16xbf16, #tpu.memory_space<vmem>>, %arg3: memref<16x32xbf16, #tpu.memory_space<vmem>>, %arg4: memref<16x32xf32, #tpu.memory_space<vmem>>) attributes {dimension_semantics = [#tpu.dimension_semantics<parallel>, #tpu.dimension_semantics<parallel>], iteration_bounds = array<i64: 1, 1>, scalar_prefetch = 0 : i64, scratch_operands = 0 : i64, tpu.core_type = #tpu.core_type<tc>, window_params = [{transform_indices = @transform_0, window_bounds = array<i64: 16, 16>}, {transform_indices = @transform_1, window_bounds = array<i64: 16, 32>}, {transform_indices = @transform_2, window_bounds = array<i64: 16, 32>}]} {
    %c0 = arith.constant 0 : index
    %c0_0 = arith.constant 0 : index
    %0 = vector.load %arg2[%c0, %c0_0] : memref<16x16xbf16, #tpu.memory_space<vmem>>, vector<16x16xbf16>
    %c0_1 = arith.constant 0 : index
    %c0_2 = arith.constant 0 : index
    %1 = vector.load %arg3[%c0_1, %c0_2] : memref<16x32xbf16, #tpu.memory_space<vmem>>, vector<16x32xbf16>
    %cst = arith.constant dense<0.000000e+00> : vector<16x32xf32>
    %2 = tpu.matmul %0, %1, %cst {dimension_numbers = #tpu.dot_dimension_numbers<[1], [0], [0], [1], [0, 0, 1, 1], [], []>} : vector<16x16xbf16>, vector<16x32xbf16>, vector<16x32xf32> -> vector<16x32xf32>
    %c0_3 = arith.constant 0 : index
    %c0_4 = arith.constant 0 : index
    %3 = vector.load %arg4[%c0_3, %c0_4] : memref<16x32xf32, #tpu.memory_space<vmem>>, vector<16x32xf32>
    tpu.vector_store %arg4[%c0_3, %c0_4], %2 {strides = array<i32>} : memref<16x32xf32, #tpu.memory_space<vmem>>, vector<16x32xf32>,
    return
  }
  func.func @transform_0(%arg0: i32, %arg1: i32) -> (i32, i32) {
    %c0_i32 = arith.constant 0 : i32
    %c0_i32_0 = arith.constant 0 : i32
    return %arg0, %c0_i32 : i32, i32
  }
  func.func @transform_1(%arg0: i32, %arg1: i32) -> (i32, i32) {
    %c0_i32 = arith.constant 0 : i32
    %c0_i32_0 = arith.constant 0 : i32
    return %c0_i32, %arg1 : i32, i32
  }
  func.func @transform_2(%arg0: i32, %arg1: i32) -> (i32, i32) {
    %c0_i32 = arith.constant 0 : i32
    return %arg0, %arg1 : i32, i32
  }
}

</mosaic_0001>

<llo_original>
// kernel: tpu_custom_call.1
$region0: #{tpu_custom_call.1}
  #allocation0 [shape = 'u32[]', space=smem, size = 0x4, offset = 0x4, fixed_abs, tag = 'smem constant byte address 0x4 - core index']
  #allocation1 [shape = 'u32[144,128]{1,0:T(1,128)}', space=vmem, size = 0x12000, scoped, tag = 'internal scratch']
  %s0 = inlined_call_operand.hbm [shape: bf16[16,16], index: 0, kind: input, shape index: {}]
  %s1 = inlined_call_operand.hbm [shape: bf16[16,32], index: 1, kind: input, shape index: {}]
  %s2 = inlined_call_operand.hbm [shape: f32[16,32], index: 2, kind: output, shape index: {}]
  %s3 = sld [smem:[#allocation0]]
  $region26: #{tpu_custom_call.1} parent=0
    _
  %s5 = ssub.s32 1, %s3
  %s6 = scalar_select 0, %s5, %s3
  $region1: #{tpu_custom_call.1} parent=0
    #allocation2 [shape = 'u8[4096]{0}', space=vmem, size = 0x1000, scoped, tag = 'input window, operand 0, single buffered']
    #allocation3 [shape = 's32[1]{0}', space=sflag, size = 0x4, scoped, tag = 'scoped memory for tpu_custom_call.1']
    #allocation4 [shape = 's32[1]{0}', space=sflag, size = 0x4, scoped, tag = 'scoped memory for tpu_custom_call.1']
    #allocation5 [shape = 'u8[4096]{0}', space=vmem, size = 0x1000, scoped, tag = 'input window, operand 1, single buffered']
    #allocation6 [shape = 's32[1]{0}', space=sflag, size = 0x4, scoped, tag = 'scoped memory for tpu_custom_call.1']
    #allocation7 [shape = 'u8[8192]{0}', space=vmem, size = 0x2000, scoped, tag = 'output window, operand 0, single buffered']
    %7 = vsyncpa [#allocation3], 0
    %8 = vsyncpa [#allocation6], 0
    %9 = vsyncpa [#allocation4], 0
    // Predicated region
    $region2: #{tpu_custom_call.1} parent=1 // pred_check
      _
    $region3: #{tpu_custom_call.1} parent=1 // pred_check_branch
      %11 = sbr.rel (0) target = $region5
    $region4: #{tpu_custom_call.1} parent=1 // pred_region
      %s13 = ssub.s32 128, 128
      %14 = vsyncadd [#allocation3], %s13
      %s15 = sshll.u32 [#allocation2], 4
      %s16 = int_to_ptr.vmem [resolvable:$true] %s15
      %21 = dma.hbm_to_vmem [thread:$0]  %s0, 128, %s16, [#allocation3], 64, 64, 4
    $region5: #{tpu_custom_call.1} parent=1 // pred_fallthru
      _
    // Predicated region
    $region6: #{tpu_custom_call.1} parent=1 // pred_check
      _
    $region7: #{tpu_custom_call.1} parent=1 // pred_check_branch
      %23 = sbr.rel (0) target = $region9
    $region8: #{tpu_custom_call.1} parent=1 // pred_region
      %s25 = ssub.s32 128, 128
      %26 = vsyncadd [#allocation6], %s25
      %s27 = sshll.u32 [#allocation5], 4
      %s28 = int_to_ptr.vmem [resolvable:$true] %s27
      %33 = dma.hbm_to_vmem [thread:$0]  %s1, 128, %s28, [#allocation6], 64, 64, 4
    $region9: #{tpu_custom_call.1} parent=1 // pred_fallthru
      _
    // Predicated region
    $region10: #{tpu_custom_call.1} parent=1 // pred_check
      _
    $region11: #{tpu_custom_call.1} parent=1 // pred_check_branch
      %35 = sbr.rel (0) target = $region13
    $region12: #{tpu_custom_call.1} parent=1 // pred_region
      %36 = dma.done [#allocation3], 128
    $region13: #{tpu_custom_call.1} parent=1 // pred_fallthru
      _
    // Predicated region
    $region14: #{tpu_custom_call.1} parent=1 // pred_check
      _
    $region15: #{tpu_custom_call.1} parent=1 // pred_check_branch
      %38 = sbr.rel (0) target = $region17
    $region16: #{tpu_custom_call.1} parent=1 // pred_region
      %39 = dma.done [#allocation6], 128
    $region17: #{tpu_custom_call.1} parent=1 // pred_fallthru
      _
    %v41 = vld [vmem:[#allocation2] sm:$0xf]
    %v42 = vld [vmem:[#allocation2 + $0x4] sm:$0xf]
    %v43 = vld [vmem:[#allocation5] sm:$0xf]
    %v44 = vld [vmem:[#allocation5 + $0x4] sm:$0xf]
    %v47 = vunpack.c.l.b16 %v41
    %v48 = vunpack.c.l.b16 %v42
    %v49 = vpack.c.b16 %v48, %v47
    %v52 = vunpack.c.l.b16 %v43
    %v53 = vunpack.c.l.b16 %v44
    %v54 = vpack.c.b16 %v53, %v52
    %vm56 = vcmask 130048
    %v58 = vsel %vm56, %v49, 0
    %60 = vmatprep.subr.bf16.mxu0 0
    %61 = vmatpush1.bf16.msra.mxu0 0
    %62 = vmatprep.subr.bf16.mxu0 0
    %63 = vmatpush1.bf16.msra.mxu0 0
    %64 = vmatprep.subr.bf16.mxu0 0
    %65 = vmatpush1.bf16.msra.mxu0 0
    %66 = vmatprep.subr.bf16.mxu0 0
    %67 = vmatpush1.bf16.msra.mxu0 0
    %68 = vmatprep.subr.bf16.mxu0 0
    %69 = vmatpush1.bf16.msra.mxu0 0
    %70 = vmatprep.subr.bf16.mxu0 0
    %71 = vmatpush1.bf16.msra.mxu0 0
    %72 = vmatprep.subr.bf16.mxu0 0
    %73 = vmatpush1.bf16.msra.mxu0 0
    %74 = vmatprep.subr.bf16.mxu0 0
    %75 = vmatpush1.bf16.msra.mxu0 %v54
    %76 = vmatprep.subr.bf16.mxu0 0
    %77 = vmatpush2.bf16.msra.mxu0 0
    %78 = vmatprep.subr.bf16.mxu0 0
    %79 = vmatpush2.bf16.msra.mxu0 0
    %80 = vmatprep.subr.bf16.mxu0 0
    %81 = vmatpush2.bf16.msra.mxu0 0
    %82 = vmatprep.subr.bf16.mxu0 0
    %83 = vmatpush2.bf16.msra.mxu0 0
    %84 = vmatprep.subr.bf16.mxu0 0
    %85 = vmatpush2.bf16.msra.mxu0 0
    %86 = vmatprep.subr.bf16.mxu0 0
    %87 = vmatpush2.bf16.msra.mxu0 0
    %88 = vmatprep.subr.bf16.mxu0 0
    %89 = vmatpush2.bf16.msra.mxu0 0
    %90 = vmatprep.subr.bf16.mxu0 0
    %91 = vmatpush2.bf16.msra.mxu0 0
    %92 = vmatprep.mubr.bf16.mxu0 0
    %93 = vmatmul.mubr.bf16.gmra.mxu0 %v58
    %v94 = vpop.f32.mrf.mxu0
    %v95 = vadd.f32 0.0, %v94
    %v96 = vpop.f32.mrf.mxu0
    %v97 = vpop.f32.mrf.mxu0
    %v98 = vadd.f32 0.0, %v97
    %v99 = vpop.f32.mrf.mxu0
    %100 = vdwg.mxu0
    %vm101 = vcmask 261120
    %102 = vst.msk [vmem:[#allocation7] sm:$0xff] %vm101, %v95
    %103 = vst.msk [vmem:[#allocation7 + $0x8] sm:$0xff] %vm101, %v98
    // Predicated region
    $region18: #{tpu_custom_call.1} parent=1 // pred_check
      _
    $region19: #{tpu_custom_call.1} parent=1 // pred_check_branch
      %105 = sbr.rel (0) target = $region21
    $region20: #{tpu_custom_call.1} parent=1 // pred_region
      %s107 = ssub.s32 256, 256
      %108 = vsyncadd [#allocation4], %s107
      %s109 = sshll.u32 [#allocation7], 4
      %s110 = int_to_ptr.vmem [resolvable:$true] %s109
      %115 = dma.vmem_to_hbm [thread:$0]  %s110, 256, %s2, [#allocation4], 128, 128, 8
    $region21: #{tpu_custom_call.1} parent=1 // pred_fallthru
      _
    // Predicated region
    $region22: #{tpu_custom_call.1} parent=1 // pred_check
      _
    $region23: #{tpu_custom_call.1} parent=1 // pred_check_branch
      %117 = sbr.rel (0) target = $region25
    $region24: #{tpu_custom_call.1} parent=1 // pred_region
      %118 = dma.done [#allocation4], 256
    $region25: #{tpu_custom_call.1} parent=1 // pred_fallthru
      _
    %119 = vsyncpa [#allocation3], 1
    %120 = vsyncpa [#allocation6], 1
    %121 = vsyncpa [#allocation4], 1

</llo_original>
